<compile_context>
chip_gen: v7x
topology: tpu7x:2x2x1
jax: 0.10.0
libtpu: 0.0.40
codegen_flags: <defaults>
</compile_context>

<pallas_src>
import jax
import jax.numpy as jnp
from jax.experimental import pallas as pl
from jax.experimental.pallas import tpu as pltpu


def _direct_v_kernel(s_ref, w1t_ref, b1t_ref, w2t_ref, b2t_ref, wvt_ref, bv_ref,
                     out_ref):
    """One batch tile, fully transposed (batch on the lane axis).

    s_ref   : [TB, D]   f32   batch tile of the state (bf16 cast happens here)
    w1t_ref : [2H, D]   bf16  both heads' first layers, transposed & row-stacked
    b1t_ref : [2H, 1]   f32
    w2t_ref : [2H, 2H]  bf16  block-diagonal second layer (W2_i^T on the diagonal)
    b2t_ref : [2H, 1]   f32
    wvt_ref : [2, 2H]   bf16  fused value heads (row i = [0 .. wv_i .. 0])
    bv_ref  : [2, 1]    f32
    out_ref : [1, TB]   f32   lane-dense output row (min over the two heads)
    """
    # Put the batch on the lane axis once; everything downstream stays lane-dense.
    s_t = jnp.transpose(s_ref[...]).astype(jnp.bfloat16)                 # [D, TB]

    # Layer 1, both heads fused: one MXU matmul, batch on lanes.
    h1 = jnp.dot(w1t_ref[...], s_t, preferred_element_type=jnp.float32)  # [2H, TB]
    h1 = jnp.maximum(h1 + b1t_ref[...], 0.0).astype(jnp.bfloat16)

    # Layer 2, both heads fused via the block-diagonal weight (zero cross terms).
    h2 = jnp.dot(w2t_ref[...], h1, preferred_element_type=jnp.float32)   # [2H, TB]
    h2 = jnp.maximum(h2 + b2t_ref[...], 0.0).astype(jnp.bfloat16)

    # Fused H->1 value heads on the MXU; result is already lane-dense.
    v = jnp.dot(wvt_ref[...], h2, preferred_element_type=jnp.float32)    # [2, TB]
    v = v + bv_ref[...]

    # Min over the two heads: a 2-row sublane reduce; unmasked (1, TB) store.
    out_ref[...] = jnp.min(v, axis=0, keepdims=True)


def _pick_tile_b(B, cap=8192):
    """Largest lane-dense (multiple-of-128) batch tile dividing B.

    Prefers a tile that leaves >= 2 grid steps so the 'parallel' batch axis can
    shard across both v7x TensorCores; falls back to a single full-batch block
    (full-array blocks are exempt from the (8,128) divisibility rule).
    """
    candidates = [t for t in range(128, min(cap, B) + 1, 128) if B % t == 0]
    two_step = [t for t in candidates if B // t >= 2]
    if two_step:
        return max(two_step)
    if candidates:
        return max(candidates)
    return B


@jax.jit
def direct_v_forward(state, params):
    """state: [B, D] float32. params: dict of stacked per-model weights.

    Returns min(value_0, value_1) with shape [B, 1] (both=False, target=False path).
    """
    B, D = state.shape
    H = params["w1"].shape[-1]

    # One-time parameter packing (tiny; stays outside the kernel's hot loop).
    # Layer 1: both heads' W1^T row-stacked -> [2H, D].
    w1t = jnp.transpose(params["w1"], (0, 2, 1)).reshape(2 * H, D).astype(jnp.bfloat16)
    b1t = params["b1"].reshape(2 * H, 1)                                  # f32
    # Layer 2: block-diagonal [2H, 2H] with W2_i^T on the diagonal.
    w2t = jnp.zeros((2 * H, 2 * H), jnp.float32)
    w2t = w2t.at[:H, :H].set(params["w2"][0].T)
    w2t = w2t.at[H:, H:].set(params["w2"][1].T)
    w2t = w2t.astype(jnp.bfloat16)
    b2t = params["b2"].reshape(2 * H, 1)                                  # f32
    # Value heads: row i = [0 .. wv_i .. 0] -> one (2,2H)@(2H,TB) MXU projection.
    wvt = jnp.zeros((2, 2 * H), jnp.float32)
    wvt = wvt.at[0, :H].set(params["wv"][0, :, 0])
    wvt = wvt.at[1, H:].set(params["wv"][1, :, 0])
    wvt = wvt.astype(jnp.bfloat16)
    bv = params["bv"].reshape(2, 1)                                       # f32

    tile_b = _pick_tile_b(B)
    grid = (B // tile_b,)

    out = pl.pallas_call(
        _direct_v_kernel,
        out_shape=jax.ShapeDtypeStruct((1, B), jnp.float32),
        grid=grid,
        in_specs=[
            pl.BlockSpec((tile_b, D), lambda i: (i, 0)),        # state: tiled over batch
            pl.BlockSpec((2 * H, D), lambda i: (0, 0)),         # resident weights
            pl.BlockSpec((2 * H, 1), lambda i: (0, 0)),
            pl.BlockSpec((2 * H, 2 * H), lambda i: (0, 0)),
            pl.BlockSpec((2 * H, 1), lambda i: (0, 0)),
            pl.BlockSpec((2, 2 * H), lambda i: (0, 0)),
            pl.BlockSpec((2, 1), lambda i: (0, 0)),
        ],
        out_specs=pl.BlockSpec((1, tile_b), lambda i: (0, i)),  # lane-dense output row
        compiler_params=pltpu.CompilerParams(
            dimension_semantics=("parallel",),                  # megacore split (v7x)
            vmem_limit_bytes=32 * 1024 * 1024,                  # headroom (v5e default: 16 MiB)
        ),
    )(state, w1t, b1t, w2t, b2t, wvt, bv)

    return out.reshape(B, 1)


def init_params(key, state_dim, hidden):
    """Deterministic synthetic parameters for the two value models + value variables."""
    ks = jax.random.split(key, 6)
    scale1 = 1.0 / jnp.sqrt(state_dim)
    scale2 = 1.0 / jnp.sqrt(hidden)
    return {
        "w1": jax.random.uniform(ks[0], (2, state_dim, hidden), jnp.float32, -scale1, scale1),
        "b1": jax.random.uniform(ks[1], (2, 1, hidden), jnp.float32, -scale1, scale1),
        "w2": jax.random.uniform(ks[2], (2, hidden, hidden), jnp.float32, -scale2, scale2),
        "b2": jax.random.uniform(ks[3], (2, 1, hidden), jnp.float32, -scale2, scale2),
        "wv": jax.random.uniform(ks[4], (2, hidden, 1), jnp.float32, -scale2, scale2),
        "bv": jax.random.uniform(ks[5], (2, 1, 1), jnp.float32, -scale2, scale2),
    }


def _reference(state, p):
    """Pure-JAX reference with the same bf16-matmul / f32-accumulate recipe."""
    sb = state.astype(jnp.bfloat16)
    vals = []
    for i in range(2):
        w1 = p["w1"][i].astype(jnp.bfloat16)
        w2 = p["w2"][i].astype(jnp.bfloat16)
        wv = p["wv"][i].astype(jnp.bfloat16)
        h1 = jnp.dot(sb, w1, preferred_element_type=jnp.float32) + p["b1"][i]
        h1 = jnp.maximum(h1, 0.0).astype(jnp.bfloat16)
        h2 = jnp.dot(h1, w2, preferred_element_type=jnp.float32) + p["b2"][i]
        h2 = jnp.maximum(h2, 0.0).astype(jnp.bfloat16)
        v = jnp.dot(h2, wv, preferred_element_type=jnp.float32) + p["bv"][i]
        vals.append(v)
    return jnp.minimum(vals[0], vals[1])


if __name__ == "__main__":
    # Batch 256 -> two 128-row tiles (exercises the grid, pipelining, and the
    # >=2-step parallel axis); state_dim = hidden = 32 as the module implies.
    B, D, H = 256, 32, 32
    key = jax.random.PRNGKey(0)
    k_state, k_params = jax.random.split(key)

    state = jax.random.normal(k_state, (B, D), jnp.float32)
    params = init_params(k_params, D, H)

    out = direct_v_forward(state, params)
    out = jax.block_until_ready(out)

    ref = _reference(state, params)
    assert out.shape == (B, 1)
    assert jnp.allclose(out, ref, atol=1e-3, rtol=1e-3), "mismatch vs reference"

    # TODO(synk): `target`, `both`, and `detach_params` branches only select/copy
    # parameter sets in Python; they reuse this same kernel (no separate compute path).
    # TODO(synk): bf16 matmul inputs introduce ~1e-3-level relative error vs a pure-f32
    # PyTorch DirectVEstimator; switch the casts to f32 if the consumer needs exact parity.
    print("KERNEL_OK")
</pallas_src>

<mosaic_0001>
module attributes {stable_mosaic.version = 11 : i64} {
  func.func @_direct_v_kernel(%arg0: i32, %arg1: memref<128x32xf32, #tpu.memory_space<vmem>>, %arg2: memref<64x32xbf16, #tpu.memory_space<vmem>>, %arg3: memref<64x1xf32, #tpu.memory_space<vmem>>, %arg4: memref<64x64xbf16, #tpu.memory_space<vmem>>, %arg5: memref<64x1xf32, #tpu.memory_space<vmem>>, %arg6: memref<2x64xbf16, #tpu.memory_space<vmem>>, %arg7: memref<2x1xf32, #tpu.memory_space<vmem>>, %arg8: memref<1x128xf32, #tpu.memory_space<vmem>>) attributes {dimension_semantics = [#tpu.dimension_semantics<parallel>], iteration_bounds = array<i64: 2>, scalar_prefetch = 0 : i64, scratch_operands = 0 : i64, tpu.core_type = #tpu.core_type<tc>, window_params = [{transform_indices = @transform_0, window_bounds = array<i64: 128, 32>}, {pipeline_mode = #tpu.pipeline_mode<synchronous>, transform_indices = @transform_1, window_bounds = array<i64: 64, 32>}, {pipeline_mode = #tpu.pipeline_mode<synchronous>, transform_indices = @transform_2, window_bounds = array<i64: 64, 1>}, {pipeline_mode = #tpu.pipeline_mode<synchronous>, transform_indices = @transform_3, window_bounds = array<i64: 64, 64>}, {pipeline_mode = #tpu.pipeline_mode<synchronous>, transform_indices = @transform_4, window_bounds = array<i64: 64, 1>}, {pipeline_mode = #tpu.pipeline_mode<synchronous>, transform_indices = @transform_5, window_bounds = array<i64: 2, 64>}, {pipeline_mode = #tpu.pipeline_mode<synchronous>, transform_indices = @transform_6, window_bounds = array<i64: 2, 1>}, {transform_indices = @transform_7, window_bounds = array<i64: 1, 128>}]} {
    %c0 = arith.constant 0 : index
    %c0_0 = arith.constant 0 : index
    %0 = vector.load %arg1[%c0, %c0_0] : memref<128x32xf32, #tpu.memory_space<vmem>>, vector<128x32xf32>
    %1 = tpu.transpose %0, [1, 0] : vector<128x32xf32> -> vector<32x128xf32>
    %2 = arith.truncf %1 : vector<32x128xf32> to vector<32x128xbf16>
    %c0_1 = arith.constant 0 : index
    %c0_2 = arith.constant 0 : index
    %3 = vector.load %arg2[%c0_1, %c0_2] : memref<64x32xbf16, #tpu.memory_space<vmem>>, vector<64x32xbf16>
    %cst = arith.constant dense<0.000000e+00> : vector<64x128xf32>
    %4 = tpu.matmul %3, %2, %cst {dimension_numbers = #tpu.dot_dimension_numbers<[1], [0], [0], [1], [0, 0, 1, 1], [], []>} : vector<64x32xbf16>, vector<32x128xbf16>, vector<64x128xf32> -> vector<64x128xf32>
    %c0_3 = arith.constant 0 : index
    %c0_4 = arith.constant 0 : index
    %5 = vector.load %arg3[%c0_3, %c0_4] : memref<64x1xf32, #tpu.memory_space<vmem>>, vector<64x1xf32>
    %6 = vector.broadcast %5 : vector<64x1xf32> to vector<64x128xf32>
    %7 = arith.addf %4, %6 : vector<64x128xf32>
    %cst_5 = arith.constant 0.000000e+00 : f32
    %8 = vector.broadcast %cst_5 : f32 to vector<64x128xf32>
    %9 = arith.maximumf %7, %8 : vector<64x128xf32>
    %10 = arith.truncf %9 : vector<64x128xf32> to vector<64x128xbf16>
    %c0_6 = arith.constant 0 : index
    %c0_7 = arith.constant 0 : index
    %11 = vector.load %arg4[%c0_6, %c0_7] : memref<64x64xbf16, #tpu.memory_space<vmem>>, vector<64x64xbf16>
    %cst_8 = arith.constant dense<0.000000e+00> : vector<64x128xf32>
    %12 = tpu.matmul %11, %10, %cst_8 {dimension_numbers = #tpu.dot_dimension_numbers<[1], [0], [0], [1], [0, 0, 1, 1], [], []>} : vector<64x64xbf16>, vector<64x128xbf16>, vector<64x128xf32> -> vector<64x128xf32>
    %c0_9 = arith.constant 0 : index
    %c0_10 = arith.constant 0 : index
    %13 = vector.load %arg5[%c0_9, %c0_10] : memref<64x1xf32, #tpu.memory_space<vmem>>, vector<64x1xf32>
    %14 = vector.broadcast %13 : vector<64x1xf32> to vector<64x128xf32>
    %15 = arith.addf %12, %14 : vector<64x128xf32>
    %cst_11 = arith.constant 0.000000e+00 : f32
    %16 = vector.broadcast %cst_11 : f32 to vector<64x128xf32>
    %17 = arith.maximumf %15, %16 : vector<64x128xf32>
    %18 = arith.truncf %17 : vector<64x128xf32> to vector<64x128xbf16>
    %c0_12 = arith.constant 0 : index
    %c0_13 = arith.constant 0 : index
    %19 = vector.load %arg6[%c0_12, %c0_13] : memref<2x64xbf16, #tpu.memory_space<vmem>>, vector<2x64xbf16>
    %cst_14 = arith.constant dense<0.000000e+00> : vector<2x128xf32>
    %20 = tpu.matmul %19, %18, %cst_14 {dimension_numbers = #tpu.dot_dimension_numbers<[1], [0], [0], [1], [0, 0, 1, 1], [], []>} : vector<2x64xbf16>, vector<64x128xbf16>, vector<2x128xf32> -> vector<2x128xf32>
    %c0_15 = arith.constant 0 : index
    %c0_16 = arith.constant 0 : index
    %21 = vector.load %arg7[%c0_15, %c0_16] : memref<2x1xf32, #tpu.memory_space<vmem>>, vector<2x1xf32>
    %22 = vector.broadcast %21 : vector<2x1xf32> to vector<2x128xf32>
    %23 = arith.addf %20, %22 : vector<2x128xf32>
    %cst_17 = arith.constant dense<0x7F800000> : vector<128xf32>
    %24 = vector.multi_reduction <minimumf>, %23, %cst_17 [0] : vector<2x128xf32> to vector<128xf32>
    %25 = vector.shape_cast %24 : vector<128xf32> to vector<1x128xf32>
    %c0_18 = arith.constant 0 : index
    %c0_19 = arith.constant 0 : index
    %26 = vector.load %arg8[%c0_18, %c0_19] : memref<1x128xf32, #tpu.memory_space<vmem>>, vector<1x128xf32>
    tpu.vector_store %arg8[%c0_18, %c0_19], %25 {strides = array<i32>} : memref<1x128xf32, #tpu.memory_space<vmem>>, vector<1x128xf32>,
    return
  }
  func.func @transform_0(%arg0: i32) -> (i32, i32) {
    %c0_i32 = arith.constant 0 : i32
    %c0_i32_0 = arith.constant 0 : i32
    return %arg0, %c0_i32 : i32, i32
  }
  func.func @transform_1(%arg0: i32) -> (i32, i32) {
    %c0_i32 = arith.constant 0 : i32
    %c0_i32_0 = arith.constant 0 : i32
    %c0_i32_1 = arith.constant 0 : i32
    return %c0_i32, %c0_i32_0 : i32, i32
  }
  func.func @transform_2(%arg0: i32) -> (i32, i32) {
    %c0_i32 = arith.constant 0 : i32
    %c0_i32_0 = arith.constant 0 : i32
    %c0_i32_1 = arith.constant 0 : i32
    return %c0_i32, %c0_i32_0 : i32, i32
  }
  func.func @transform_3(%arg0: i32) -> (i32, i32) {
    %c0_i32 = arith.constant 0 : i32
    %c0_i32_0 = arith.constant 0 : i32
    %c0_i32_1 = arith.constant 0 : i32
    return %c0_i32, %c0_i32_0 : i32, i32
  }
  func.func @transform_4(%arg0: i32) -> (i32, i32) {
    %c0_i32 = arith.constant 0 : i32
    %c0_i32_0 = arith.constant 0 : i32
    %c0_i32_1 = arith.constant 0 : i32
    return %c0_i32, %c0_i32_0 : i32, i32
  }
  func.func @transform_5(%arg0: i32) -> (i32, i32) {
    %c0_i32 = arith.constant 0 : i32
    %c0_i32_0 = arith.constant 0 : i32
    %c0_i32_1 = arith.constant 0 : i32
    return %c0_i32, %c0_i32_0 : i32, i32
  }
  func.func @transform_6(%arg0: i32) -> (i32, i32) {
    %c0_i32 = arith.constant 0 : i32
    %c0_i32_0 = arith.constant 0 : i32
    %c0_i32_1 = arith.constant 0 : i32
    return %c0_i32, %c0_i32_0 : i32, i32
  }
  func.func @transform_7(%arg0: i32) -> (i32, i32) {
    %c0_i32 = arith.constant 0 : i32
    %c0_i32_0 = arith.constant 0 : i32
    return %c0_i32, %arg0 : i32, i32
  }
}

</mosaic_0001>

<llo_original>
// kernel: direct_v_forward.1
$region0: #{direct_v_forward.1}
  #allocation0 [shape = 'u32[]', space=smem, size = 0x4, offset = 0x4, fixed_abs, tag = 'smem constant byte address 0x4 - core index']
  #allocation1 [shape = 'u32[144,128]{1,0:T(1,128)}', space=vmem, size = 0x12000, scoped, tag = 'internal scratch']
  %s0 = inlined_call_operand.vmem [shape: f32[256,32], index: 0, kind: input, shape index: {}]
  %s1 = inlined_call_operand.vmem [shape: bf16[64,32], index: 1, kind: input, shape index: {}]
  %s2 = inlined_call_operand.vmem [shape: f32[64,1], index: 2, kind: input, shape index: {}]
  %s3 = inlined_call_operand.vmem [shape: bf16[64,64], index: 3, kind: input, shape index: {}]
  %s4 = inlined_call_operand.vmem [shape: f32[64,1], index: 4, kind: input, shape index: {}]
  %s5 = inlined_call_operand.vmem [shape: bf16[2,64], index: 5, kind: input, shape index: {}]
  %s6 = inlined_call_operand.vmem [shape: f32[2,1], index: 6, kind: input, shape index: {}]
  %s7 = inlined_call_operand.hbm [shape: f32[1,256], index: 7, kind: output, shape index: {}]
  %s8 = sld [smem:[#allocation0]]
  $region61: #{direct_v_forward.1} parent=0
    _
  %s10 = ssub.s32 1, %s8
  %s11 = scalar_select 0, %s10, %s8
  $region1: #{direct_v_forward.1} parent=0
    #allocation2 [shape = 'u8[1024]{0}', space=vmem, size = 0x400, scoped, tag = 'output window, operand 0']
    #allocation3 [shape = 's32[2]{0}', space=sflag, size = 0x8, scoped, tag = 'scoped memory for direct_v_forward.1']
    %12 = vsyncpa [#allocation3], 0
    %s13 = scalar_lea.sflag [#allocation3], 1
    %14 = vsyncpa %s13, 0
    loop: start=0, step=1, limit=4
    $region2: #{direct_v_forward.1} parent=1 // loop_pre_header
      _
    $region3: #{direct_v_forward.1} parent=1 // loop_header
      %s16 = sphi 0, %s20
      %p17 = scmp.ge.s32.totalorder %s16, 4
      %s26 = sphi 0, %s28
      %s29 = sphi 0, %s26
      %s30 = sphi 0, %s29
      %s46 = sphi 0, %s30
      %s50 = sphi 0, %s50
      %s52 = sphi 0, %s50
      %s53 = sphi 0, %s52
      %s67 = sphi 0, %s53
      %s71 = sphi 0, %s71
      %s73 = sphi 0, %s71
      %s74 = sphi 0, %s73
      %s88 = sphi 0, %s74
      %s92 = sphi 0, %s92
      %s94 = sphi 0, %s92
      %s95 = sphi 0, %s94
      %s109 = sphi 0, %s95
      %s113 = sphi 0, %s113
      %s115 = sphi 0, %s113
      %s116 = sphi 0, %s115
      %s130 = sphi 0, %s116
      %s134 = sphi 0, %s134
      %s136 = sphi 0, %s134
      %s137 = sphi 0, %s136
      %s151 = sphi 0, %s137
      %s155 = sphi 0, %s155
      %s157 = sphi 0, %s155
      %s158 = sphi 0, %s157
      %s172 = sphi 0, %s158
      %s178 = sphi 0, %s180
      %s181 = sphi 0, %s178
      %s182 = sphi 0, %s181
      %s198 = sphi 0, %s182
    $region4: #{direct_v_forward.1} parent=1 // loop_header_branch
      %19 = sbr.rel (%p17) target = $region8
    $region5: #{direct_v_forward.1} parent=1 // loop_body
      %s21 = ssub.s32 %s16, 1
      %s22 = ssub.s32 %s16, 2
      %s23 = sadd.s32 %s16, 1
      %s24 = ssub.s32 %s16, %s23
      %p25 = scmp.eq.s32.totalorder %s24, 0
      %s27 = sadd.s32 %s26, 1
      %s28 = scalar_select %p25, %s26, %s27
      %p31 = pneg %p25
      %p32 = scmp.eq.s32.totalorder %s16, 1
      %p33 = por %p31, %p32
      %p34 = scmp.ne.s32.totalorder %s26, %s29
      %p35 = scmp.eq.s32.totalorder %s16, 0
      %p36 = por %p34, %p35
      %p37 = scmp.ne.s32.totalorder %s26, %s29
      %p38 = scmp.eq.s32.totalorder %s21, 1
      %p39 = por %p37, %p38
      %p40 = scmp.ne.s32.totalorder %s29, %s30
      %p41 = scmp.eq.s32.totalorder %s21, 0
      %p42 = por %p40, %p41
      %p43 = scmp.ne.s32.totalorder %s29, %s30
      %p44 = scmp.eq.s32.totalorder %s22, 1
      %p45 = por %p43, %p44
      %p47 = scmp.ne.s32.totalorder %s30, %s46
      %p48 = scmp.eq.s32.totalorder %s22, 0
      %p49 = por %p47, %p48
      %s51 = sadd.s32 %s50, 1
      %p54 = scmp.eq.s32.totalorder %s16, 1
      %p55 = scmp.ne.s32.totalorder %s50, %s52
      %p56 = scmp.eq.s32.totalorder %s16, 0
      %p57 = por %p55, %p56
      %p58 = scmp.ne.s32.totalorder %s50, %s52
      %p59 = scmp.eq.s32.totalorder %s21, 1
      %p60 = por %p58, %p59
      %p61 = scmp.ne.s32.totalorder %s52, %s53
      %p62 = scmp.eq.s32.totalorder %s21, 0
      %p63 = por %p61, %p62
      %p64 = scmp.ne.s32.totalorder %s52, %s53
      %p65 = scmp.eq.s32.totalorder %s22, 1
      %p66 = por %p64, %p65
      %p68 = scmp.ne.s32.totalorder %s53, %s67
      %p69 = scmp.eq.s32.totalorder %s22, 0
      %p70 = por %p68, %p69
      %s72 = sadd.s32 %s71, 1
      %p75 = scmp.eq.s32.totalorder %s16, 1
      %p76 = scmp.ne.s32.totalorder %s71, %s73
      %p77 = scmp.eq.s32.totalorder %s16, 0
      %p78 = por %p76, %p77
      %p79 = scmp.ne.s32.totalorder %s71, %s73
      %p80 = scmp.eq.s32.totalorder %s21, 1
      %p81 = por %p79, %p80
      %p82 = scmp.ne.s32.totalorder %s73, %s74
      %p83 = scmp.eq.s32.totalorder %s21, 0
      %p84 = por %p82, %p83
      %p85 = scmp.ne.s32.totalorder %s73, %s74
      %p86 = scmp.eq.s32.totalorder %s22, 1
      %p87 = por %p85, %p86
      %p89 = scmp.ne.s32.totalorder %s74, %s88
      %p90 = scmp.eq.s32.totalorder %s22, 0
      %p91 = por %p89, %p90
      %s93 = sadd.s32 %s92, 1
      %p96 = scmp.eq.s32.totalorder %s16, 1
      %p97 = scmp.ne.s32.totalorder %s92, %s94
      %p98 = scmp.eq.s32.totalorder %s16, 0
      %p99 = por %p97, %p98
      %p100 = scmp.ne.s32.totalorder %s92, %s94
      %p101 = scmp.eq.s32.totalorder %s21, 1
      %p102 = por %p100, %p101
      %p103 = scmp.ne.s32.totalorder %s94, %s95
      %p104 = scmp.eq.s32.totalorder %s21, 0
      %p105 = por %p103, %p104
      %p106 = scmp.ne.s32.totalorder %s94, %s95
      %p107 = scmp.eq.s32.totalorder %s22, 1
      %p108 = por %p106, %p107
      %p110 = scmp.ne.s32.totalorder %s95, %s109
      %p111 = scmp.eq.s32.totalorder %s22, 0
      %p112 = por %p110, %p111
      %s114 = sadd.s32 %s113, 1
      %p117 = scmp.eq.s32.totalorder %s16, 1
      %p118 = scmp.ne.s32.totalorder %s113, %s115
      %p119 = scmp.eq.s32.totalorder %s16, 0
      %p120 = por %p118, %p119
      %p121 = scmp.ne.s32.totalorder %s113, %s115
      %p122 = scmp.eq.s32.totalorder %s21, 1
      %p123 = por %p121, %p122
      %p124 = scmp.ne.s32.totalorder %s115, %s116
      %p125 = scmp.eq.s32.totalorder %s21, 0
      %p126 = por %p124, %p125
      %p127 = scmp.ne.s32.totalorder %s115, %s116
      %p128 = scmp.eq.s32.totalorder %s22, 1
      %p129 = por %p127, %p128
      %p131 = scmp.ne.s32.totalorder %s116, %s130
      %p132 = scmp.eq.s32.totalorder %s22, 0
      %p133 = por %p131, %p132
      %s135 = sadd.s32 %s134, 1
      %p138 = scmp.eq.s32.totalorder %s16, 1
      %p139 = scmp.ne.s32.totalorder %s134, %s136
      %p140 = scmp.eq.s32.totalorder %s16, 0
      %p141 = por %p139, %p140
      %p142 = scmp.ne.s32.totalorder %s134, %s136
      %p143 = scmp.eq.s32.totalorder %s21, 1
      %p144 = por %p142, %p143
      %p145 = scmp.ne.s32.totalorder %s136, %s137
      %p146 = scmp.eq.s32.totalorder %s21, 0
      %p147 = por %p145, %p146
      %p148 = scmp.ne.s32.totalorder %s136, %s137
      %p149 = scmp.eq.s32.totalorder %s22, 1
      %p150 = por %p148, %p149
      %p152 = scmp.ne.s32.totalorder %s137, %s151
      %p153 = scmp.eq.s32.totalorder %s22, 0
      %p154 = por %p152, %p153
      %s156 = sadd.s32 %s155, 1
      %p159 = scmp.eq.s32.totalorder %s16, 1
      %p160 = scmp.ne.s32.totalorder %s155, %s157
      %p161 = scmp.eq.s32.totalorder %s16, 0
      %p162 = por %p160, %p161
      %p163 = scmp.ne.s32.totalorder %s155, %s157
      %p164 = scmp.eq.s32.totalorder %s21, 1
      %p165 = por %p163, %p164
      %p166 = scmp.ne.s32.totalorder %s157, %s158
      %p167 = scmp.eq.s32.totalorder %s21, 0
      %p168 = por %p166, %p167
      %p169 = scmp.ne.s32.totalorder %s157, %s158
      %p170 = scmp.eq.s32.totalorder %s22, 1
      %p171 = por %p169, %p170
      %p173 = scmp.ne.s32.totalorder %s158, %s172
      %p174 = scmp.eq.s32.totalorder %s22, 0
      %p175 = por %p173, %p174
      %s176 = ssub.s32 %s16, %s23
      %p177 = scmp.eq.s32.totalorder %s176, 0
      %s179 = sadd.s32 %s178, 1
      %s180 = scalar_select %p177, %s178, %s179
      %p183 = pneg %p177
      %p184 = scmp.eq.s32.totalorder %s16, 1
      %p185 = por %p183, %p184
      %p186 = scmp.ne.s32.totalorder %s178, %s181
      %p187 = scmp.eq.s32.totalorder %s16, 0
      %p188 = por %p186, %p187
      %p189 = scmp.ne.s32.totalorder %s178, %s181
      %p190 = scmp.eq.s32.totalorder %s21, 1
      %p191 = por %p189, %p190
      %p192 = scmp.ne.s32.totalorder %s181, %s182
      %p193 = scmp.eq.s32.totalorder %s21, 0
      %p194 = por %p192, %p193
      %p195 = scmp.ne.s32.totalorder %s181, %s182
      %p196 = scmp.eq.s32.totalorder %s22, 1
      %p197 = por %p195, %p196
      %p199 = scmp.ne.s32.totalorder %s182, %s198
      %p200 = scmp.eq.s32.totalorder %s22, 0
      %p201 = por %p199, %p200
      %p202 = scmp.le.s32.totalorder 1, %s16
      %p203 = scmp.lt.s32.totalorder %s16, 3
      %p204 = pnand %p202, %p203
      %p205 = pneg %p204
      // Predicated region
      $region9: #{direct_v_forward.1} parent=5 // pred_check
        _
      $region10: #{direct_v_forward.1} parent=5 // pred_check_branch
        %207 = sbr.rel (%p204) target = $region12
      $region11: #{direct_v_forward.1} parent=5 // pred_region
        %s208 = ssub.s32 %s16, 1
        // Predicated region
        $region13: #{direct_v_forward.1} parent=11 // pred_check
          %p209 = pneg %p63
        $region14: #{direct_v_forward.1} parent=11 // pred_check_branch
          %211 = sbr.rel (%p209) target = $region16
        $region15: #{direct_v_forward.1} parent=11 // pred_region
          _
        $region16: #{direct_v_forward.1} parent=11 // pred_fallthru
          _
        // Predicated region
        $region17: #{direct_v_forward.1} parent=11 // pred_check
          %p212 = pneg %p84
        $region18: #{direct_v_forward.1} parent=11 // pred_check_branch
          %214 = sbr.rel (%p212) target = $region20
        $region19: #{direct_v_forward.1} parent=11 // pred_region
          _
        $region20: #{direct_v_forward.1} parent=11 // pred_fallthru
          _
        // Predicated region
        $region21: #{direct_v_forward.1} parent=11 // pred_check
          %p215 = pneg %p105
        $region22: #{direct_v_forward.1} parent=11 // pred_check_branch
          %217 = sbr.rel (%p215) target = $region24
        $region23: #{direct_v_forward.1} parent=11 // pred_region
          _
        $region24: #{direct_v_forward.1} parent=11 // pred_fallthru
          _
        // Predicated region
        $region25: #{direct_v_forward.1} parent=11 // pred_check
          %p218 = pneg %p126
        $region26: #{direct_v_forward.1} parent=11 // pred_check_branch
          %220 = sbr.rel (%p218) target = $region28
        $region27: #{direct_v_forward.1} parent=11 // pred_region
          _
        $region28: #{direct_v_forward.1} parent=11 // pred_fallthru
          _
        // Predicated region
        $region29: #{direct_v_forward.1} parent=11 // pred_check
          %p221 = pneg %p147
        $region30: #{direct_v_forward.1} parent=11 // pred_check_branch
          %223 = sbr.rel (%p221) target = $region32
        $region31: #{direct_v_forward.1} parent=11 // pred_region
          _
        $region32: #{direct_v_forward.1} parent=11 // pred_fallthru
          _
        // Predicated region
        $region33: #{direct_v_forward.1} parent=11 // pred_check
          %p224 = pneg %p168
        $region34: #{direct_v_forward.1} parent=11 // pred_check_branch
          %226 = sbr.rel (%p224) target = $region36
        $region35: #{direct_v_forward.1} parent=11 // pred_region
          _
        $region36: #{direct_v_forward.1} parent=11 // pred_fallthru
          _
      $region12: #{direct_v_forward.1} parent=5 // pred_fallthru
        _
      %p227 = scmp.lt.s32.totalorder %s16, 2
      // Predicated region
      $region37: #{direct_v_forward.1} parent=5 // pred_check
        %p228 = pneg %p227
      $region38: #{direct_v_forward.1} parent=5 // pred_check_branch
        %230 = sbr.rel (%p228) target = $region40
      $region39: #{direct_v_forward.1} parent=5 // pred_region
        // Predicated region
        $region41: #{direct_v_forward.1} parent=39 // pred_check
          %p231 = pneg %p36
        $region42: #{direct_v_forward.1} parent=39 // pred_check_branch
          %233 = sbr.rel (%p231) target = $region44
        $region43: #{direct_v_forward.1} parent=39 // pred_region
          %s234 = smul.u32 16, %s16
          %p235 = scmp.lt.s32.totalorder %s234, 31
          %s236 = scalar_select %p235, %s234, 31
          %s237 = smul.addr %s236, 8
          %s238 = scalar_lea.vmem %s0, %s237
          %s239 = smul.u32 16, %s16
        $region44: #{direct_v_forward.1} parent=39 // pred_fallthru
          _
      $region40: #{direct_v_forward.1} parent=5 // pred_fallthru
        _
      %p240 = scmp.le.s32.totalorder 1, %s16
      %p241 = scmp.lt.s32.totalorder %s16, 3
      %p242 = pnand %p240, %p241
      %p243 = pneg %p242
      // Predicated region
      $region45: #{direct_v_forward.1} parent=5 // pred_check
        _
      $region46: #{direct_v_forward.1} parent=5 // pred_check_branch
        %245 = sbr.rel (%p242) target = $region48
      $region47: #{direct_v_forward.1} parent=5 // pred_region
        %s246 = ssub.s32 %s16, 1
        %s247 = smul.u32 16, %s21
        %p248 = scmp.lt.s32.totalorder %s247, 31
        %s249 = scalar_select %p248, %s247, 31
        %s250 = smul.addr %s249, 8
        %s251 = scalar_lea.vmem %s0, %s250
        %p252 = pneg %p42
        %p253 = pneg %p39
        %p254 = pneg %p63
        %p255 = pneg %p60
        %p256 = pneg %p84
        %p257 = pneg %p81
        %p258 = pneg %p105
        %p259 = pneg %p102
        %p260 = pneg %p126
        %p261 = pneg %p123
        %p262 = pneg %p147
        %p263 = pneg %p144
        %p264 = pneg %p168
        %p265 = pneg %p165
        %p266 = pneg %p194
        %p267 = pneg %p191
        %s268 = sand.u32 %s181, 1
        %s269 = scalar_lea.sflag [#allocation3], %s268
        %s270 = sand.u32 %s181, 1
        %s271 = scalar_lea.vmem [#allocation2], %s270
        %s272 = smul.u32 16, %s21
        %p273 = scmp.lt.s32.totalorder %s272, 31
        %s274 = scalar_select %p273, %s272, 31
        %s275 = smul.addr %s274, 8
        %s276 = scalar_lea.vmem %s0, %s275
        %s277 = smul.u32 16, %s21
        %v279 = vld [vmem:[%s276] sm:$0xff]
        %v280 = vld [vmem:[%s276 + $0x8] sm:$0xff]
        %v281 = vld [vmem:[%s276 + $0x10] sm:$0xff]
        %v282 = vld [vmem:[%s276 + $0x18] sm:$0xff]
        %v283 = vld [vmem:[%s276 + $0x20] sm:$0xff]
        %v284 = vld [vmem:[%s276 + $0x28] sm:$0xff]
        %v285 = vld [vmem:[%s276 + $0x30] sm:$0xff]
        %v286 = vld [vmem:[%s276 + $0x38] sm:$0xff]
        %v287 = vld [vmem:[%s276 + $0x40] sm:$0xff]
        %v288 = vld [vmem:[%s276 + $0x48] sm:$0xff]
        %v289 = vld [vmem:[%s276 + $0x50] sm:$0xff]
        %v290 = vld [vmem:[%s276 + $0x58] sm:$0xff]
        %v291 = vld [vmem:[%s276 + $0x60] sm:$0xff]
        %v292 = vld [vmem:[%s276 + $0x68] sm:$0xff]
        %v293 = vld [vmem:[%s276 + $0x70] sm:$0xff]
        %v294 = vld [vmem:[%s276 + $0x78] sm:$0xff]
        %295 = vxpose.xlu0.b32.start [1/16] %v279, 128
        %296 = vxpose.xlu0.b32.cont [2/16] %v280, 128
        %297 = vxpose.xlu0.b32.cont [3/16] %v281, 128
        %298 = vxpose.xlu0.b32.cont [4/16] %v282, 128
        %299 = vxpose.xlu0.b32.cont [5/16] %v283, 128
        %300 = vxpose.xlu0.b32.cont [6/16] %v284, 128
        %301 = vxpose.xlu0.b32.cont [7/16] %v285, 128
        %302 = vxpose.xlu0.b32.cont [8/16] %v286, 128
        %303 = vxpose.xlu0.b32.cont [9/16] %v287, 128
        %304 = vxpose.xlu0.b32.cont [10/16] %v288, 128
        %305 = vxpose.xlu0.b32.cont [11/16] %v289, 128
        %306 = vxpose.xlu0.b32.cont [12/16] %v290, 128
        %307 = vxpose.xlu0.b32.cont [13/16] %v291, 128
        %308 = vxpose.xlu0.b32.cont [14/16] %v292, 128
        %309 = vxpose.xlu0.b32.cont [15/16] %v293, 128
        %310 = vxpose.xlu0.b32.end [16/16] %v294, 128
        %v311 = vpop.trf.xlu0
        %v312 = vpop.trf.xlu0
        %v313 = vpop.trf.xlu0
        %v314 = vpop.trf.xlu0
        %v315 = vpop.trf.xlu0
        %v316 = vpop.trf.xlu0
        %v317 = vpop.trf.xlu0
        %v318 = vpop.trf.xlu0
        %v319 = vpop.trf.xlu0
        %v320 = vpop.trf.xlu0
        %v321 = vpop.trf.xlu0
        %v322 = vpop.trf.xlu0
        %v323 = vpop.trf.xlu0
        %v324 = vpop.trf.xlu0
        %v325 = vpop.trf.xlu0
        %v326 = vpop.trf.xlu0
        %v327 = vpack.c.bf16 %v312, %v311
        %v328 = vpack.c.bf16 %v314, %v313
        %v329 = vld [vmem:[%s1] sm:$0xf]
        %v330 = vld [vmem:[%s1 + $0x4] sm:$0xf]
        %v331 = vld [vmem:[%s1 + $0x8] sm:$0xf]
        %v332 = vld [vmem:[%s1 + $0xc] sm:$0xf]
        %v333 = vld [vmem:[%s1 + $0x10] sm:$0xf]
        %v334 = vld [vmem:[%s1 + $0x14] sm:$0xf]
        %v335 = vld [vmem:[%s1 + $0x18] sm:$0xf]
        %v336 = vld [vmem:[%s1 + $0x1c] sm:$0xf]
        %v337 = vld [vmem:[%s2] sm:$0xff]
        %v338 = vld [vmem:[%s2 + $0x8] sm:$0xff]
        %v339 = vld [vmem:[%s2 + $0x10] sm:$0xff]
        %v340 = vld [vmem:[%s2 + $0x18] sm:$0xff]
        %v341 = vld [vmem:[%s2 + $0x20] sm:$0xff]
        %v342 = vld [vmem:[%s2 + $0x28] sm:$0xff]
        %v343 = vld [vmem:[%s2 + $0x30] sm:$0xff]
        %v344 = vld [vmem:[%s2 + $0x38] sm:$0xff]
        %346 = vset.pattern.permute.xlu0 0
        %347 = vperm.xlu0 %346, %v337
        %v348 = vpop.permute.xlu0 %347
        %351 = vset.pattern.permute.xlu0 0
        %352 = vperm.xlu0 %351, %v338
        %v353 = vpop.permute.xlu0 %352
        %356 = vset.pattern.permute.xlu0 0
        %357 = vperm.xlu0 %356, %v339
        %v358 = vpop.permute.xlu0 %357
        %361 = vset.pattern.permute.xlu0 0
        %362 = vperm.xlu0 %361, %v340
        %v363 = vpop.permute.xlu0 %362
        %366 = vset.pattern.permute.xlu0 0
        %367 = vperm.xlu0 %366, %v341
        %v368 = vpop.permute.xlu0 %367
        %371 = vset.pattern.permute.xlu0 0
        %372 = vperm.xlu0 %371, %v342
        %v373 = vpop.permute.xlu0 %372
        %376 = vset.pattern.permute.xlu0 0
        %377 = vperm.xlu0 %376, %v343
        %v378 = vpop.permute.xlu0 %377
        %381 = vset.pattern.permute.xlu0 0
        %382 = vperm.xlu0 %381, %v344
        %v383 = vpop.permute.xlu0 %382
        %v393 = vunpack.c.l.b16 %v329
        %v394 = vunpack.c.l.b16 %v330
        %v395 = vunpack.c.l.b16 %v331
        %v396 = vunpack.c.l.b16 %v332
        %v397 = vunpack.c.l.b16 %v333
        %v398 = vunpack.c.l.b16 %v334
        %v399 = vunpack.c.l.b16 %v335
        %v400 = vunpack.c.l.b16 %v336
        %v401 = vpack.c.b16 %v394, %v393
        %v402 = vpack.c.b16 %v396, %v395
        %v403 = vpack.c.b16 %v398, %v397
        %v404 = vpack.c.b16 %v400, %v399
        %vm405 = vcmask 261120
        %v407 = vsel %vm405, %v401, 0
        %v410 = vsel %vm405, %v402, 0
        %v413 = vsel %vm405, %v403, 0
        %v416 = vsel %vm405, %v404, 0
        %418 = vmatprep.subr.bf16.mxu0 0
        %419 = vmatpush1.bf16.msra.mxu0 %v327
        %420 = vmatprep.subr.bf16.mxu0 0
        %421 = vmatpush1.bf16.msra.mxu0 %v328
        %422 = vmatprep.subr.bf16.mxu0 0
        %423 = vmatpush1.bf16.msra.mxu0 0
        %424 = vmatprep.subr.bf16.mxu0 0
        %425 = vmatpush1.bf16.msra.mxu0 0
        %426 = vmatprep.subr.bf16.mxu0 0
        %427 = vmatpush1.bf16.msra.mxu0 0
        %428 = vmatprep.subr.bf16.mxu0 0
        %429 = vmatpush1.bf16.msra.mxu0 0
        %430 = vmatprep.subr.bf16.mxu0 0
        %431 = vmatpush1.bf16.msra.mxu0 0
        %432 = vmatprep.subr.bf16.mxu0 0
        %433 = vmatpush1.bf16.msra.mxu0 0
        %434 = vmatprep.subr.bf16.mxu0 0
        %435 = vmatpush1.bf16.msra.mxu0 0
        %436 = vmatprep.subr.bf16.mxu0 0
        %437 = vmatpush1.bf16.msra.mxu0 0
        %438 = vmatprep.subr.bf16.mxu0 0
        %439 = vmatpush1.bf16.msra.mxu0 0
        %440 = vmatprep.subr.bf16.mxu0 0
        %441 = vmatpush1.bf16.msra.mxu0 0
        %442 = vmatprep.subr.bf16.mxu0 0
        %443 = vmatpush1.bf16.msra.mxu0 0
        %444 = vmatprep.subr.bf16.mxu0 0
        %445 = vmatpush1.bf16.msra.mxu0 0
        %446 = vmatprep.subr.bf16.mxu0 0
        %447 = vmatpush1.bf16.msra.mxu0 0
        %448 = vmatprep.subr.bf16.mxu0 0
        %449 = vmatpush1.bf16.msra.mxu0 0
        %450 = vmatprep.mubr.bf16.mxu0 0
        %451 = vmatmul.mubr.bf16.gmra.mrb[0].mxu0 %v407
        %v452 = vpop.f32.mrb[0].mxu0
        %v453 = vadd.f32 %v348, %v452
        %v454 = vpop.f32.mrb[0].mxu0
        %v455 = vpop.f32.mrb[0].mxu0
        %v456 = vadd.f32 %v353, %v455
        %v457 = vpop.f32.mrb[0].mxu0
        %458 = vmatprep.mubr.bf16.mxu0 0
        %459 = vmatmul.mubr.bf16.gmra.mrb[0].mxu0 %v410
        %v460 = vpop.f32.mrb[0].mxu0
        %v461 = vadd.f32 %v358, %v460
        %v462 = vpop.f32.mrb[0].mxu0
        %v463 = vpop.f32.mrb[0].mxu0
        %v464 = vadd.f32 %v363, %v463
        %v465 = vpop.f32.mrb[0].mxu0
        %466 = vmatprep.mubr.bf16.mxu0 0
        %467 = vmatmul.mubr.bf16.gmra.mrb[0].mxu0 %v413
        %v468 = vpop.f32.mrb[0].mxu0
        %v469 = vadd.f32 %v368, %v468
        %v470 = vpop.f32.mrb[0].mxu0
        %v471 = vpop.f32.mrb[0].mxu0
        %v472 = vadd.f32 %v373, %v471
        %v473 = vpop.f32.mrb[0].mxu0
        %474 = vmatprep.mubr.bf16.mxu0 0
        %475 = vmatmul.mubr.bf16.gmra.mrb[0].mxu0 %v416
        %v476 = vpop.f32.mrb[0].mxu0
        %v477 = vadd.f32 %v378, %v476
        %v478 = vpop.f32.mrb[0].mxu0
        %v479 = vpop.f32.mrb[0].mxu0
        %v480 = vadd.f32 %v383, %v479
        %v481 = vpop.f32.mrb[0].mxu0
        %482 = vdwg.mxu0
        %v483 = vmax.f32 %v453, 0.0
        %v484 = vmax.f32 %v456, 0.0
        %v485 = vmax.f32 %v461, 0.0
        %v486 = vmax.f32 %v464, 0.0
        %v487 = vmax.f32 %v469, 0.0
        %v488 = vmax.f32 %v472, 0.0
        %v489 = vmax.f32 %v477, 0.0
        %v490 = vmax.f32 %v480, 0.0
        %v491 = vpack.c.bf16 %v484, %v483
        %v492 = vpack.c.bf16 %v486, %v485
        %v493 = vpack.c.bf16 %v488, %v487
        %v494 = vpack.c.bf16 %v490, %v489
        %v495 = vld [vmem:[%s3] sm:$0xf]
        %v496 = vld [vmem:[%s3 + $0x4] sm:$0xf]
        %v497 = vld [vmem:[%s3 + $0x8] sm:$0xf]
        %v498 = vld [vmem:[%s3 + $0xc] sm:$0xf]
        %v499 = vld [vmem:[%s3 + $0x10] sm:$0xf]
        %v500 = vld [vmem:[%s3 + $0x14] sm:$0xf]
        %v501 = vld [vmem:[%s3 + $0x18] sm:$0xf]
        %v502 = vld [vmem:[%s3 + $0x1c] sm:$0xf]
        %v503 = vld [vmem:[%s4] sm:$0xff]
        %v504 = vld [vmem:[%s4 + $0x8] sm:$0xff]
        %v505 = vld [vmem:[%s4 + $0x10] sm:$0xff]
        %v506 = vld [vmem:[%s4 + $0x18] sm:$0xff]
        %v507 = vld [vmem:[%s4 + $0x20] sm:$0xff]
        %v508 = vld [vmem:[%s4 + $0x28] sm:$0xff]
        %v509 = vld [vmem:[%s4 + $0x30] sm:$0xff]
        %v510 = vld [vmem:[%s4 + $0x38] sm:$0xff]
        %512 = vset.pattern.permute.xlu0 0
        %513 = vperm.xlu0 %512, %v503
        %v514 = vpop.permute.xlu0 %513
        %517 = vset.pattern.permute.xlu0 0
        %518 = vperm.xlu0 %517, %v504
        %v519 = vpop.permute.xlu0 %518
        %522 = vset.pattern.permute.xlu0 0
        %523 = vperm.xlu0 %522, %v505
        %v524 = vpop.permute.xlu0 %523
        %527 = vset.pattern.permute.xlu0 0
        %528 = vperm.xlu0 %527, %v506
        %v529 = vpop.permute.xlu0 %528
        %532 = vset.pattern.permute.xlu0 0
        %533 = vperm.xlu0 %532, %v507
        %v534 = vpop.permute.xlu0 %533
        %537 = vset.pattern.permute.xlu0 0
        %538 = vperm.xlu0 %537, %v508
        %v539 = vpop.permute.xlu0 %538
        %542 = vset.pattern.permute.xlu0 0
        %543 = vperm.xlu0 %542, %v509
        %v544 = vpop.permute.xlu0 %543
        %547 = vset.pattern.permute.xlu0 0
        %548 = vperm.xlu0 %547, %v510
        %v549 = vpop.permute.xlu0 %548
        %v559 = vunpack.c.l.b16 %v495
        %v560 = vunpack.c.l.b16 %v496
        %v561 = vunpack.c.l.b16 %v497
        %v562 = vunpack.c.l.b16 %v498
        %v563 = vunpack.c.l.b16 %v499
        %v564 = vunpack.c.l.b16 %v500
        %v565 = vunpack.c.l.b16 %v501
        %v566 = vunpack.c.l.b16 %v502
        %v567 = vpack.c.b16 %v560, %v559
        %v568 = vpack.c.b16 %v562, %v561
        %v569 = vpack.c.b16 %v564, %v563
        %v570 = vpack.c.b16 %v566, %v565
        %vm571 = vcmask 523264
        %v573 = vsel %vm571, %v567, 0
        %v576 = vsel %vm571, %v568, 0
        %v579 = vsel %vm571, %v569, 0
        %v582 = vsel %vm571, %v570, 0
        %584 = vmatprep.subr.bf16.mxu0 0
        %585 = vmatpush1.bf16.msra.mxu0 %v491
        %586 = vmatprep.subr.bf16.mxu0 0
        %587 = vmatpush1.bf16.msra.mxu0 %v492
        %588 = vmatprep.subr.bf16.mxu0 0
        %589 = vmatpush1.bf16.msra.mxu0 %v493
        %590 = vmatprep.subr.bf16.mxu0 0
        %591 = vmatpush1.bf16.msra.mxu0 %v494
        %592 = vmatprep.subr.bf16.mxu0 0
        %593 = vmatpush1.bf16.msra.mxu0 0
        %594 = vmatprep.subr.bf16.mxu0 0
        %595 = vmatpush1.bf16.msra.mxu0 0
        %596 = vmatprep.subr.bf16.mxu0 0
        %597 = vmatpush1.bf16.msra.mxu0 0
        %598 = vmatprep.subr.bf16.mxu0 0
        %599 = vmatpush1.bf16.msra.mxu0 0
        %600 = vmatprep.subr.bf16.mxu0 0
        %601 = vmatpush1.bf16.msra.mxu0 0
        %602 = vmatprep.subr.bf16.mxu0 0
        %603 = vmatpush1.bf16.msra.mxu0 0
        %604 = vmatprep.subr.bf16.mxu0 0
        %605 = vmatpush1.bf16.msra.mxu0 0
        %606 = vmatprep.subr.bf16.mxu0 0
        %607 = vmatpush1.bf16.msra.mxu0 0
        %608 = vmatprep.subr.bf16.mxu0 0
        %609 = vmatpush1.bf16.msra.mxu0 0
        %610 = vmatprep.subr.bf16.mxu0 0
        %611 = vmatpush1.bf16.msra.mxu0 0
        %612 = vmatprep.subr.bf16.mxu0 0
        %613 = vmatpush1.bf16.msra.mxu0 0
        %614 = vmatprep.subr.bf16.mxu0 0
        %615 = vmatpush1.bf16.msra.mxu0 0
        %616 = vmatprep.mubr.bf16.mxu0 0
        %617 = vmatmul.mubr.bf16.gmra.mrb[0].mxu0 %v573
        %v618 = vpop.f32.mrb[0].mxu0
        %v619 = vadd.f32 %v514, %v618
        %v620 = vpop.f32.mrb[0].mxu0
        %v621 = vpop.f32.mrb[0].mxu0
        %v622 = vadd.f32 %v519, %v621
        %v623 = vpop.f32.mrb[0].mxu0
        %624 = vmatprep.mubr.bf16.mxu0 0
        %625 = vmatmul.mubr.bf16.gmra.mrb[0].mxu0 %v576
        %v626 = vpop.f32.mrb[0].mxu0
        %v627 = vadd.f32 %v524, %v626
        %v628 = vpop.f32.mrb[0].mxu0
        %v629 = vpop.f32.mrb[0].mxu0
        %v630 = vadd.f32 %v529, %v629
        %v631 = vpop.f32.mrb[0].mxu0
        %632 = vmatprep.mubr.bf16.mxu0 0
        %633 = vmatmul.mubr.bf16.gmra.mrb[0].mxu0 %v579
        %v634 = vpop.f32.mrb[0].mxu0
        %v635 = vadd.f32 %v534, %v634
        %v636 = vpop.f32.mrb[0].mxu0
        %v637 = vpop.f32.mrb[0].mxu0
        %v638 = vadd.f32 %v539, %v637
        %v639 = vpop.f32.mrb[0].mxu0
        %640 = vmatprep.mubr.bf16.mxu0 0
        %641 = vmatmul.mubr.bf16.gmra.mrb[0].mxu0 %v582
        %v642 = vpop.f32.mrb[0].mxu0
        %v643 = vadd.f32 %v544, %v642
        %v644 = vpop.f32.mrb[0].mxu0
        %v645 = vpop.f32.mrb[0].mxu0
        %v646 = vadd.f32 %v549, %v645
        %v647 = vpop.f32.mrb[0].mxu0
        %648 = vdwg.mxu0
        %v649 = vmax.f32 %v619, 0.0
        %v650 = vmax.f32 %v622, 0.0
        %v651 = vmax.f32 %v627, 0.0
        %v652 = vmax.f32 %v630, 0.0
        %v653 = vmax.f32 %v635, 0.0
        %v654 = vmax.f32 %v638, 0.0
        %v655 = vmax.f32 %v643, 0.0
        %v656 = vmax.f32 %v646, 0.0
        %v657 = vpack.c.bf16 %v650, %v649
        %v658 = vpack.c.bf16 %v652, %v651
        %v659 = vpack.c.bf16 %v654, %v653
        %v660 = vpack.c.bf16 %v656, %v655
        %v661 = vld [vmem:[%s5] sm:$0x1]
        %v662 = vld [vmem:[%s6] sm:$0x3]
        %664 = vset.pattern.permute.xlu0 0
        %665 = vperm.xlu0 %664, %v662
        %v666 = vpop.permute.xlu0 %665
        %v669 = vsel %vm571, %v661, 0
        %671 = vmatprep.subr.bf16.mxu0 0
        %672 = vmatpush1.bf16.msra.mxu0 %v657
        %673 = vmatprep.subr.bf16.mxu0 0
        %674 = vmatpush1.bf16.msra.mxu0 %v658
        %675 = vmatprep.subr.bf16.mxu0 0
        %676 = vmatpush1.bf16.msra.mxu0 %v659
        %677 = vmatprep.subr.bf16.mxu0 0
        %678 = vmatpush1.bf16.msra.mxu0 %v660
        %679 = vmatprep.subr.bf16.mxu0 0
        %680 = vmatpush1.bf16.msra.mxu0 0
        %681 = vmatprep.subr.bf16.mxu0 0
        %682 = vmatpush1.bf16.msra.mxu0 0
        %683 = vmatprep.subr.bf16.mxu0 0
        %684 = vmatpush1.bf16.msra.mxu0 0
        %685 = vmatprep.subr.bf16.mxu0 0
        %686 = vmatpush1.bf16.msra.mxu0 0
        %687 = vmatprep.subr.bf16.mxu0 0
        %688 = vmatpush1.bf16.msra.mxu0 0
        %689 = vmatprep.subr.bf16.mxu0 0
        %690 = vmatpush1.bf16.msra.mxu0 0
        %691 = vmatprep.subr.bf16.mxu0 0
        %692 = vmatpush1.bf16.msra.mxu0 0
        %693 = vmatprep.subr.bf16.mxu0 0
        %694 = vmatpush1.bf16.msra.mxu0 0
        %695 = vmatprep.subr.bf16.mxu0 0
        %696 = vmatpush1.bf16.msra.mxu0 0
        %697 = vmatprep.subr.bf16.mxu0 0
        %698 = vmatpush1.bf16.msra.mxu0 0
        %699 = vmatprep.subr.bf16.mxu0 0
        %700 = vmatpush1.bf16.msra.mxu0 0
        %701 = vmatprep.subr.bf16.mxu0 0
        %702 = vmatpush1.bf16.msra.mxu0 0
        %703 = vmatprep.mubr.bf16.mxu0 0
        %704 = vmatmul.mubr.bf16.gmra.mrb[0].mxu0 %v669
        %v705 = vpop.f32.mrb[0].mxu0
        %v706 = vadd.f32 %v666, %v705
        %v707 = vpop.f32.mrb[0].mxu0
        %v708 = vpop.f32.mrb[0].mxu0
        %v709 = vpop.f32.mrb[0].mxu0
        %710 = vdwg.mxu0
        %vm711 = vcmask 1041408
        %v712 = vsel %vm711, %v706, inf
        %v713 = vrot.slane %v712, 4
        %v714 = vmin.f32 %v712, %v713
        %v715 = vrot.slane %v714, 2
        %v716 = vmin.f32 %v714, %v715
        %v717 = vrot.slane %v716, 1
        %v718 = vmin.f32 %v716, %v717
        %719 = vst [vmem:[%s271] sm:$0x1] %v718
        %s720 = sand.u32 %s181, 1
        %s721 = scalar_lea.sflag [#allocation3], %s720
        %s722 = sand.u32 %s181, 1
        %s723 = scalar_lea.vmem [#allocation2], %s722
        // Predicated region
        $region49: #{direct_v_forward.1} parent=47 // pred_check
          %p724 = pneg %p191
        $region50: #{direct_v_forward.1} parent=47 // pred_check_branch
          %726 = sbr.rel (%p724) target = $region52
        $region51: #{direct_v_forward.1} parent=47 // pred_region
          %s728 = ssub.s32 16, 16
          %729 = vsyncadd %s721, %s728
          %s730 = smul.addr %s21, 16
          %s731 = scalar_lea.hbm %s7, %s730
          %s733 = sshll.u32 %s723, 4
          %s734 = int_to_ptr.vmem [resolvable:$true] %s733
          %736 = dma.vmem_to_hbm [thread:$0]  %s734, 16, %s731, %s721
        $region52: #{direct_v_forward.1} parent=47 // pred_fallthru
          _
      $region48: #{direct_v_forward.1} parent=5 // pred_fallthru
        _
      %p737 = scmp.le.s32.totalorder 2, %s16
      // Predicated region
      $region53: #{direct_v_forward.1} parent=5 // pred_check
        %p738 = pneg %p737
      $region54: #{direct_v_forward.1} parent=5 // pred_check_branch
        %740 = sbr.rel (%p738) target = $region56
      $region55: #{direct_v_forward.1} parent=5 // pred_region
        %s741 = ssub.s32 %s16, 2
        // Predicated region
        $region57: #{direct_v_forward.1} parent=55 // pred_check
          %p742 = pneg %p197
        $region58: #{direct_v_forward.1} parent=55 // pred_check_branch
          %744 = sbr.rel (%p742) target = $region60
        $region59: #{direct_v_forward.1} parent=55 // pred_region
          %s745 = sand.u32 %s182, 1
          %s746 = scalar_lea.sflag [#allocation3], %s745
          %s747 = sand.u32 %s182, 1
          %s748 = scalar_lea.vmem [#allocation2], %s747
          %749 = dma.done %s746, 16
        $region60: #{direct_v_forward.1} parent=55 // pred_fallthru
          _
      $region56: #{direct_v_forward.1} parent=5 // pred_fallthru
        _
    $region6: #{direct_v_forward.1} parent=1 // loop_footer
      %s20 = sadd.s32 1, %s16
    $region7: #{direct_v_forward.1} parent=1 // loop_footer_branch
      %15 = sbr.rel target = $region3
    $region8: #{direct_v_forward.1} parent=1 // loop_exit
      _
    %750 = vsyncpa [#allocation3], 1
    %s751 = scalar_lea.sflag [#allocation3], 1
    %752 = vsyncpa %s751, 1

</llo_original>
